<compile_context>
chip_gen: v7x
topology: tpu7x:2x2x1
jax: 0.10.0
libtpu: 0.0.40
codegen_flags: <defaults>
</compile_context>

<pallas_src>
import functools

import jax
import jax.numpy as jnp
from jax import lax
from jax.experimental import pallas as pl
from jax.experimental.pallas import tpu as pltpu

LANES = 128


def _round_up(a, b):
    return -(-a // b) * b


def _cdiv(a, b):
    return -(-a // b)


def _tpu_config():
    """Per-generation (max_row_tile, max_shards, vmem_limit_bytes)."""
    try:
        kind = jax.devices()[0].device_kind.lower()
    except Exception:
        kind = ""
    if "v7" in kind:
        # v7x: 2 TensorCores/chip, 64 MiB VMEM/TC, ~3.2 TB/s HBM.
        # (8192,128) f32 = 4 MiB/input/step -> 16 MiB double-buffered.
        return 8192, 2, 40 * 1024 * 1024
    if "v5 lite" in kind or "v5lite" in kind or "v5e" in kind:
        # v5e: single TC, tight default scoped VMEM -> smaller tile.
        return 4096, 1, 24 * 1024 * 1024
    # v6e (and default): single TC, 128 MiB VMEM.
    return 8192, 1, 48 * 1024 * 1024


def _sublane_grain(dtype):
    # Native sublane packing: f32 -> 8, bf16/f16 -> 16, int8/fp8 -> 32.
    return max(8, 32 // jnp.dtype(dtype).itemsize)


def _bce_kernel(x_ref, t_ref, out_ref, *, bpc, row_tile, m_rows, need_mask):
    """Accumulate per-shard soft-target BCE partial sums into an (8, 128) slab."""
    c = pl.program_id(0)   # shard (parallel; size 1 on single-TC chips)
    i = pl.program_id(1)   # block within shard (reduction; resident accumulator)

    @pl.when(i == 0)
    def _():
        out_ref[...] = jnp.zeros_like(out_ref)

    x = x_ref[...].astype(jnp.float32)
    t = t_ref[...].astype(jnp.float32)

    # Stable rewrite of -(t*log(sigmoid(x)) + (1-t)*log(1-sigmoid(x))):
    #   max(x, 0) - x*t + log(1 + exp(-|x|))
    # TODO(synk): on v7x, if a bundle dump shows the single EUP binding, compute
    # exp(-|x|) in bf16 (EUP bf16 ~2x f32) and keep the log/accumulate in f32.
    loss = jnp.maximum(x, 0.0) - x * t + jnp.log(1.0 + jnp.exp(-jnp.abs(x)))

    def _accumulate(vals):
        # (row_tile,128) -> (row_tile//8, 8, 128) -> vadd chain -> one (8,128) vreg.
        out_ref[...] += vals.reshape(row_tile // 8, 8, LANES).sum(axis=0)

    if need_mask:
        g = c * bpc + i                 # global block index (un-clamped)
        valid = m_rows - g * row_tile   # rows of real data in this block

        @pl.when(valid >= row_tile)     # steady state: unmasked accumulate
        def _():
            _accumulate(loss)

        @pl.when(valid < row_tile)      # boundary / clamped block only pays the mask
        def _():
            row_ids = lax.broadcasted_iota(jnp.int32, (row_tile, LANES), 0)
            _accumulate(jnp.where(row_ids < valid, loss, 0.0))
    else:
        _accumulate(loss)


@jax.jit
def soft_target_bce(x, target):
    assert x.shape == target.shape, "x and target must have the same shape"
    n_elems = x.size

    max_row_tile, max_shards, vmem_limit = _tpu_config()
    grain = max(_sublane_grain(x.dtype), _sublane_grain(target.dtype))

    # Flatten to a lane-dense [m_rows, 128] view (no dtype cast here).
    xf = x.reshape(-1)
    tf = target.reshape(-1)
    n_pad = (-n_elems) % LANES
    if n_pad:
        # Rare ragged-lane fallback: pad with x=0, t=0. Each pad element adds
        # exactly log(2) to the sum; subtracted below (no mask array in HBM).
        xf = jnp.pad(xf, (0, n_pad))
        tf = jnp.pad(tf, (0, n_pad))
    m_rows = (n_elems + n_pad) // LANES
    x2 = xf.reshape(m_rows, LANES)
    t2 = tf.reshape(m_rows, LANES)

    # ---- tiling --------------------------------------------------------
    num_shards = max_shards if m_rows >= max_shards * grain else 1
    if num_shards > 1:
        # Split the blocks evenly between the shards: no duplicated clamped
        # block in the common case and no load imbalance between TensorCores.
        bpc = max(1, _cdiv(_cdiv(m_rows, num_shards), max_row_tile))
        row_tile = _round_up(_cdiv(m_rows, num_shards * bpc), grain)
    else:
        row_tile = min(max_row_tile, _round_up(m_rows, grain))
        bpc = _cdiv(m_rows, row_tile)

    need_mask = (num_shards * bpc * row_tile) != m_rows
    last_block = _cdiv(m_rows, row_tile) - 1

    if num_shards > 1:
        # Clamp so every DMA window starts in-bounds; a clamped duplicate block
        # (only possible when need_mask) is fully zeroed by the in-kernel mask.
        def in_index(c, i):
            return (jnp.minimum(c * bpc + i, last_block), 0)
    else:
        def in_index(c, i):
            return (i, 0)   # monotonic, un-clamped DMA stream

    in_spec = pl.BlockSpec((row_tile, LANES), in_index)
    # Lane-dense output slab; same block across the reduction axis -> resident accumulator.
    out_spec = pl.BlockSpec((None, 8, LANES), lambda c, i: (c, 0, 0))

    kernel = functools.partial(
        _bce_kernel, bpc=bpc, row_tile=row_tile, m_rows=m_rows, need_mask=need_mask)

    cost = pl.CostEstimate(
        flops=5 * n_elems,
        transcendentals=2 * n_elems,
        bytes_accessed=n_elems * (x.dtype.itemsize + target.dtype.itemsize)
        + num_shards * 8 * LANES * 4,
    )

    partials = pl.pallas_call(
        kernel,
        out_shape=jax.ShapeDtypeStruct((num_shards, 8, LANES), jnp.float32),
        grid_spec=pltpu.PrefetchScalarGridSpec(
            num_scalar_prefetch=0,
            grid=(num_shards, bpc),
            in_specs=[in_spec, in_spec],
            out_specs=out_spec,
        ),
        compiler_params=pltpu.CompilerParams(
            dimension_semantics=("parallel", "arbitrary"),
            vmem_limit_bytes=vmem_limit,
        ),
        cost_estimate=cost,
    )(x2, t2)

    # Glue: final tiny reduce + mean.
    total = jnp.sum(partials)
    if n_pad:
        total = total - jnp.float32(n_pad) * jnp.log(jnp.float32(2.0))
    return (total / jnp.float32(n_elems)).astype(jnp.float32)


if __name__ == "__main__":
    key = jax.random.PRNGKey(0)
    kx, kt = jax.random.split(key)

    # NCHW logits and soft targets in [0, 1]
    x = jax.random.normal(kx, (2, 4, 16, 16), dtype=jnp.float32)
    target = jax.random.uniform(kt, (2, 4, 16, 16), dtype=jnp.float32)

    out = soft_target_bce(x, target)
    out = jax.block_until_ready(out)

    # Reference: the exact naive formula from the PyTorch module.
    s = jax.nn.sigmoid(x.astype(jnp.float32))
    ref = jnp.mean(-(target * jnp.log(s) + (1.0 - target) * jnp.log(1.0 - s)))

    assert jnp.allclose(out, ref, rtol=1e-5, atol=1e-5), (out, ref)
    print("KERNEL_OK")
</pallas_src>

<mosaic_0001>
module attributes {stable_mosaic.version = 11 : i64} {
  func.func @_bce_kernel(%arg0: i32, %arg1: i32, %arg2: memref<16x128xf32, #tpu.memory_space<vmem>>, %arg3: memref<16x128xf32, #tpu.memory_space<vmem>>, %arg4: memref<1x8x128xf32, #tpu.memory_space<vmem>>) attributes {dimension_semantics = [#tpu.dimension_semantics<parallel>, #tpu.dimension_semantics<arbitrary>], iteration_bounds = array<i64: 1, 1>, scalar_prefetch = 0 : i64, scratch_operands = 0 : i64, tpu.core_type = #tpu.core_type<tc>, window_params = [{transform_indices = @transform_0, window_bounds = array<i64: 16, 128>}, {transform_indices = @transform_1, window_bounds = array<i64: 16, 128>}, {transform_indices = @transform_2, window_bounds = array<i64: 1, 8, 128>}]} {
    %c0_i32 = arith.constant 0 : i32
    %0 = arith.cmpi eq, %arg1, %c0_i32 : i32
    %1 = arith.extui %0 : i1 to i32
    %c0_i32_0 = arith.constant 0 : i32
    %2 = arith.cmpi ne, %1, %c0_i32_0 : i32
    scf.if %2 {
      %cst_13 = arith.constant 0.000000e+00 : f32
      %25 = vector.broadcast %cst_13 : f32 to vector<8x128xf32>
      %c0_14 = arith.constant 0 : index
      %c0_15 = arith.constant 0 : index
      %c0_16 = arith.constant 0 : index
      %26 = vector.load %arg4[%c0_14, %c0_15, %c0_16] : memref<1x8x128xf32, #tpu.memory_space<vmem>>, vector<1x8x128xf32>
      %27 = vector.shape_cast %26 : vector<1x8x128xf32> to vector<8x128xf32>
      %28 = vector.shape_cast %25 : vector<8x128xf32> to vector<1x8x128xf32>
      tpu.vector_store %arg4[%c0_14, %c0_15, %c0_16], %28 {strides = array<i32>} : memref<1x8x128xf32, #tpu.memory_space<vmem>>, vector<1x8x128xf32>,
    } else {
    }
    %c0 = arith.constant 0 : index
    %c0_1 = arith.constant 0 : index
    %3 = vector.load %arg2[%c0, %c0_1] : memref<16x128xf32, #tpu.memory_space<vmem>>, vector<16x128xf32>
    %c0_2 = arith.constant 0 : index
    %c0_3 = arith.constant 0 : index
    %4 = vector.load %arg3[%c0_2, %c0_3] : memref<16x128xf32, #tpu.memory_space<vmem>>, vector<16x128xf32>
    %cst = arith.constant 0.000000e+00 : f32
    %5 = vector.broadcast %cst : f32 to vector<16x128xf32>
    %6 = arith.maximumf %3, %5 : vector<16x128xf32>
    %7 = arith.mulf %3, %4 : vector<16x128xf32>
    %8 = arith.subf %6, %7 : vector<16x128xf32>
    %9 = math.absf %3 : vector<16x128xf32>
    %cst_4 = arith.constant 0.000000e+00 : f32
    %10 = vector.broadcast %cst_4 : f32 to vector<16x128xf32>
    %11 = arith.subf %10, %9 : vector<16x128xf32>
    %12 = math.exp %11 : vector<16x128xf32>
    %cst_5 = arith.constant 1.000000e+00 : f32
    %13 = vector.broadcast %cst_5 : f32 to vector<16x128xf32>
    %14 = arith.addf %13, %12 : vector<16x128xf32>
    %15 = math.log %14 : vector<16x128xf32>
    %16 = arith.addf %8, %15 : vector<16x128xf32>
    %c0_6 = arith.constant 0 : index
    %c0_7 = arith.constant 0 : index
    %c0_8 = arith.constant 0 : index
    %17 = vector.load %arg4[%c0_6, %c0_7, %c0_8] : memref<1x8x128xf32, #tpu.memory_space<vmem>>, vector<1x8x128xf32>
    %18 = vector.shape_cast %17 : vector<1x8x128xf32> to vector<8x128xf32>
    %19 = vector.shape_cast %16 : vector<16x128xf32> to vector<2x8x128xf32>
    %cst_9 = arith.constant dense<0.000000e+00> : vector<8x128xf32>
    %20 = vector.multi_reduction <add>, %19, %cst_9 [0] : vector<2x8x128xf32> to vector<8x128xf32>
    %21 = arith.addf %18, %20 : vector<8x128xf32>
    %c0_10 = arith.constant 0 : index
    %c0_11 = arith.constant 0 : index
    %c0_12 = arith.constant 0 : index
    %22 = vector.load %arg4[%c0_10, %c0_11, %c0_12] : memref<1x8x128xf32, #tpu.memory_space<vmem>>, vector<1x8x128xf32>
    %23 = vector.shape_cast %22 : vector<1x8x128xf32> to vector<8x128xf32>
    %24 = vector.shape_cast %21 : vector<8x128xf32> to vector<1x8x128xf32>
    tpu.vector_store %arg4[%c0_10, %c0_11, %c0_12], %24 {strides = array<i32>} : memref<1x8x128xf32, #tpu.memory_space<vmem>>, vector<1x8x128xf32>,
    return
  }
  func.func @transform_0(%arg0: i32, %arg1: i32) -> (i32, i32) {
    %c0_i32 = arith.constant 0 : i32
    %c0_i32_0 = arith.constant 0 : i32
    return %arg1, %c0_i32 : i32, i32
  }
  func.func @transform_1(%arg0: i32, %arg1: i32) -> (i32, i32) {
    %c0_i32 = arith.constant 0 : i32
    %c0_i32_0 = arith.constant 0 : i32
    return %arg1, %c0_i32 : i32, i32
  }
  func.func @transform_2(%arg0: i32, %arg1: i32) -> (i32, i32, i32) {
    %c0_i32 = arith.constant 0 : i32
    %c0_i32_0 = arith.constant 0 : i32
    %c0_i32_1 = arith.constant 0 : i32
    return %arg0, %c0_i32, %c0_i32_0 : i32, i32, i32
  }
}

</mosaic_0001>

<llo_original>
// kernel: soft_target_bce.1
$region0: #{soft_target_bce.1}
  #allocation0 [shape = 'u32[]', space=smem, size = 0x4, offset = 0x4, fixed_abs, tag = 'smem constant byte address 0x4 - core index']
  #allocation1 [shape = 'u32[144,128]{1,0:T(1,128)}', space=vmem, size = 0x12000, scoped, tag = 'internal scratch']
  %s0 = inlined_call_operand.vmem [shape: f32[16,128], index: 0, kind: input, shape index: {}]
  %s1 = inlined_call_operand.vmem [shape: f32[16,128], index: 1, kind: input, shape index: {}]
  %s2 = inlined_call_operand.vmem [shape: f32[1,8,128], index: 2, kind: output, shape index: {}]
  %s3 = sld [smem:[#allocation0]]
  $region22: #{soft_target_bce.1} parent=0
    _
  %s5 = ssub.s32 1, %s3
  %s6 = scalar_select 0, %s5, %s3
  // Predicated region
  $region2: #{soft_target_bce.1} parent=0 // pred_check
    _
  $region3: #{soft_target_bce.1} parent=0 // pred_check_branch
    %8 = sbr.rel (0) target = $region5
  $region4: #{soft_target_bce.1} parent=0 // pred_region
    _
  $region5: #{soft_target_bce.1} parent=0 // pred_fallthru
    _
  // Predicated region
  $region6: #{soft_target_bce.1} parent=0 // pred_check
    _
  $region7: #{soft_target_bce.1} parent=0 // pred_check_branch
    %10 = sbr.rel (0) target = $region9
  $region8: #{soft_target_bce.1} parent=0 // pred_region
    _
  $region9: #{soft_target_bce.1} parent=0 // pred_fallthru
    _
  %p11 = scmp.eq.s32.totalorder 0, 0
  // Predicated region
  $region10: #{soft_target_bce.1} parent=0 // pred_check
    %p12 = pneg %p11
  $region11: #{soft_target_bce.1} parent=0 // pred_check_branch
    %14 = sbr.rel (%p12) target = $region13
  $region12: #{soft_target_bce.1} parent=0 // pred_region
    %15 = vst [vmem:[%s2] sm:$0xff] 0.0
  $region13: #{soft_target_bce.1} parent=0 // pred_fallthru
    _
  %v16 = vld [vmem:[%s0] sm:$0xff]
  %v17 = vld [vmem:[%s0 + $0x8] sm:$0xff]
  %v18 = vld [vmem:[%s1] sm:$0xff]
  %v19 = vld [vmem:[%s1 + $0x8] sm:$0xff]
  %v20 = vmax.f32 %v16, 0.0
  %v21 = vmax.f32 %v17, 0.0
  %v22 = vmul.f32 %v16, %v18
  %v23 = vmul.f32 %v17, %v19
  %v24 = vsub.f32 %v20, %v22
  %v25 = vsub.f32 %v21, %v23
  %v26 = vand.u32 2147483647, %v16
  %v27 = vand.u32 2147483647, %v17
  %v28 = vsub.f32 0.0, %v26
  %v29 = vsub.f32 0.0, %v27
  %v30 = vmul.f32 %v28, 1.442695
  %v31 = vpow.pop %v30
  %v32 = vmul.f32 %v29, 1.442695
  %v33 = vpow.pop %v32
  %v34 = vadd.f32 %v31, 1.0
  %v35 = vadd.f32 %v33, 1.0
  %v36 = vlog2.pop %v34
  %v37 = vmul.f32 %v36, 0.6931472
  %v38 = vlog2.pop %v35
  %v39 = vmul.f32 %v38, 0.6931472
  %v40 = vadd.f32 %v24, %v37
  %v41 = vadd.f32 %v25, %v39
  %v42 = vld [vmem:[%s2] sm:$0xff]
  %v43 = vadd.f32 %v40, %v41
  %v44 = vadd.f32 %v42, %v43
  %45 = vst [vmem:[%s2] sm:$0xff] %v44
  // Predicated region
  $region14: #{soft_target_bce.1} parent=0 // pred_check
    _
  $region15: #{soft_target_bce.1} parent=0 // pred_check_branch
    %47 = sbr.rel (0) target = $region17
  $region16: #{soft_target_bce.1} parent=0 // pred_region
    _
  $region17: #{soft_target_bce.1} parent=0 // pred_fallthru
    _
  // Predicated region
  $region18: #{soft_target_bce.1} parent=0 // pred_check
    _
  $region19: #{soft_target_bce.1} parent=0 // pred_check_branch
    %49 = sbr.rel (0) target = $region21
  $region20: #{soft_target_bce.1} parent=0 // pred_region
    _
  $region21: #{soft_target_bce.1} parent=0 // pred_fallthru
    _

</llo_original>
